<compile_context>
chip_gen: v5e
topology: v5e:2x2
jax: 0.10.0
libtpu: 0.0.40
codegen_flags: <defaults>
</compile_context>

<pallas_src>
import functools

import jax
import jax.numpy as jnp
from jax.experimental import pallas as pl
from jax.experimental.pallas import tpu as pltpu


def _rnn_recurrence_kernel(xp_ref, w_hh_ref, w_fc_ref, b_fc_ref, out_ref, h_ref,
                           *, tc, rem, unroll):
    """Processes one (batch-tile, time-chunk) grid cell.

    xp_ref  : (Tc, Bt, H)  pre-projected inputs (x @ W_ih + b_ih + b_hh), time-major
    w_hh_ref: (H, H)       recurrent weight (pre-transposed), bf16 or f32
    w_fc_ref: (H, O)       output head weight (pre-transposed), f32
    b_fc_ref: (1, O)       output head bias, f32
    out_ref : (Bt, O)      final output (written on the last time chunk)
    h_ref   : (Bt, H) f32  hidden-state scratch, resident across time chunks
    """
    c = pl.program_id(1)            # time-chunk index (minor / sequential axis)
    last = pl.num_programs(1) - 1

    # h_0 = 0 at the start of every batch tile's time sweep.  Correctness relies on
    # the time axis being the MINOR grid axis (iterated innermost) — do not reorder.
    @pl.when(c == 0)
    def _init():
        h_ref[...] = jnp.zeros_like(h_ref)

    w_hh = w_hh_ref[...]

    def step(s, h):
        # Only the recurrent matmul + relu are on the serial critical path.
        pre = xp_ref[s].astype(jnp.float32) + jnp.dot(
            h.astype(w_hh.dtype), w_hh, preferred_element_type=jnp.float32)
        return jnp.maximum(pre, 0.0)

    def run(nsteps, unroll_n):
        return jax.lax.fori_loop(0, nsteps, step, h_ref[...], unroll=unroll_n)

    if rem == tc:
        # Every chunk is full: one unmasked loop, no branch on the serial path.
        h_ref[...] = run(tc, unroll)
    else:
        # Full chunks: unmasked loop of Tc steps.
        @pl.when(c != last)
        def _full():
            h_ref[...] = run(tc, unroll)

        # Tail chunk: only the `rem` valid steps — no per-step compare/select.
        @pl.when(c == last)
        def _tail():
            h_ref[...] = run(rem, True if rem <= 64 else 8)

    # On the final time chunk, apply the fc head to h_T and write the output.
    @pl.when(c == last)
    def _finalize():
        h_t = h_ref[...]
        out_ref[...] = (jnp.dot(h_t, w_fc_ref[...],
                                preferred_element_type=jnp.float32)
                        + b_fc_ref[...]).astype(out_ref.dtype)


def _vmem_capacity_bytes():
    """Physical VMEM of the current chip; conservative 64 MiB fallback (v7x-safe)."""
    try:
        info = pltpu.get_tpu_info()
        cap = getattr(info, "vmem_capacity_bytes", None)
        if cap:
            return int(cap)
    except Exception:
        pass
    return 64 * 1024 * 1024


def rnn_imc_forward(x, params, *, max_time_chunk=256, batch_tile=None,
                    matmul_dtype=jnp.bfloat16):
    """x: (B, T, D) float32 (batch_first, like the PyTorch module)."""
    w_ih, w_hh, b_ih, b_hh, w_fc, b_fc = params
    B, T, D = x.shape
    H = w_hh.shape[0]
    O = w_fc.shape[1]

    # --- Batch tiling: split the "parallel" grid axis so v7x's two TensorCores
    # each get an independent batch half; small batches keep Bt = B (one program,
    # maximal MXU M per step — matches single-TC v5e/v6e behaviour).
    if batch_tile is None:
        Bt = B // 2 if (B >= 256 and (B // 2) % 8 == 0) else B
    else:
        Bt = batch_tile
    assert B % Bt == 0, "batch_tile must divide B"
    assert Bt == B or Bt % 8 == 0, "batch_tile must be B or a multiple of 8 (sublane)"

    # --- Hoisted, non-recurrent input projection: one big MXU-friendly matmul that
    # also emits the time-major layout directly (no separate transpose of x).
    # Stored in matmul_dtype (bf16 by default) to halve the streamed HBM bytes.
    bias = (b_ih + b_hh).reshape(1, 1, H).astype(jnp.float32)
    xproj = (jnp.einsum("btd,dh->tbh", x, w_ih,
                        preferred_element_type=jnp.float32) + bias
             ).astype(matmul_dtype)                     # (T, B, H)

    w_hh_in = w_hh.astype(matmul_dtype)
    w_fc_in = w_fc.astype(jnp.float32)
    b_fc_in = b_fc.astype(jnp.float32)

    # --- Generation-aware VMEM budget and Tc derivation.
    xp_item = jnp.dtype(matmul_dtype).itemsize
    f32_item = 4
    phys = _vmem_capacity_bytes()
    budget = int(phys * 0.75)  # headroom for Mosaic internal scratch

    # Weights are double-buffered by the default pipeliner (constant index map), so
    # budget 2x their size.  Scratch: hidden state + (double-buffered) output tile.
    w_bytes = 2 * (H * H * xp_item + (H * O + O) * f32_item)
    scratch_bytes = Bt * H * f32_item + 2 * Bt * O * f32_item
    per_step_bytes = 2 * Bt * H * xp_item          # double-buffered xproj rows
    avail = budget - w_bytes - scratch_bytes
    tc_cap = max(8, avail // per_step_bytes) if per_step_bytes > 0 else 8
    Tc = int(min(T, max_time_chunk, tc_cap))
    n_chunks = int(pl.cdiv(T, Tc))
    rem = T - (n_chunks - 1) * Tc                  # 1 <= rem <= Tc (static)

    needed = w_bytes + scratch_bytes + 2 * Tc * Bt * H * xp_item
    vmem_limit = int(min(budget, max(16 * 1024 * 1024, int(needed * 1.5))))

    unroll = True if Tc <= 64 else 8

    kernel = functools.partial(_rnn_recurrence_kernel, tc=Tc, rem=rem, unroll=unroll)

    return pl.pallas_call(
        kernel,
        out_shape=jax.ShapeDtypeStruct((B, O), jnp.float32),
        grid_spec=pltpu.PrefetchScalarGridSpec(
            num_scalar_prefetch=0,
            grid=(B // Bt, n_chunks),             # (batch tiles, time chunks)
            in_specs=[
                pl.BlockSpec((Tc, Bt, H), lambda b, c: (c, b, 0)),  # xproj chunk
                pl.BlockSpec((H, H), lambda b, c: (0, 0)),          # W_hh^T (resident)
                pl.BlockSpec((H, O), lambda b, c: (0, 0)),          # W_fc^T (resident)
                pl.BlockSpec((1, O), lambda b, c: (0, 0)),          # b_fc
            ],
            out_specs=pl.BlockSpec((Bt, O), lambda b, c: (b, 0)),   # per batch tile
            scratch_shapes=[pltpu.VMEM((Bt, H), jnp.float32)],      # hidden state
        ),
        compiler_params=pltpu.CompilerParams(
            dimension_semantics=("parallel", "arbitrary"),  # batch parallel, time serial
            vmem_limit_bytes=vmem_limit,
        ),
    )(xproj, w_hh_in, w_fc_in, b_fc_in)


def init_params(key, input_dim, hidden_dim, output_dim):
    """Deterministic init mimicking PyTorch's U(-1/sqrt(H), 1/sqrt(H)).

    Weights are stored pre-transposed for the kernel: (D,H), (H,H), (H,O).
    A real PyTorch state_dict must be transposed before being passed in.
    """
    ks = jax.random.split(key, 6)
    bound = 1.0 / jnp.sqrt(hidden_dim)
    u = lambda k, shape: jax.random.uniform(k, shape, jnp.float32, -bound, bound)
    w_ih = u(ks[0], (input_dim, hidden_dim))
    w_hh = u(ks[1], (hidden_dim, hidden_dim))
    b_ih = u(ks[2], (1, hidden_dim))
    b_hh = u(ks[3], (1, hidden_dim))
    w_fc = u(ks[4], (hidden_dim, output_dim))
    b_fc = u(ks[5], (1, output_dim))
    return (w_ih, w_hh, b_ih, b_hh, w_fc, b_fc)


def reference_forward(x, params):
    """Pure-JAX reference (mirrors the PyTorch forward) for validation."""
    w_ih, w_hh, b_ih, b_hh, w_fc, b_fc = params
    B, T, D = x.shape
    H = w_hh.shape[0]
    h = jnp.zeros((B, H), jnp.float32)
    for t in range(T):
        h = jax.nn.relu(x[:, t, :] @ w_ih + h @ w_hh + b_ih + b_hh)
    return h @ w_fc + b_fc


if __name__ == "__main__":
    B, T, D, H, O = 2, 8, 16, 32, 10
    key = jax.random.PRNGKey(0)
    kx, kp, kx2 = jax.random.split(key, 3)
    x = jax.random.normal(kx, (B, T, D), jnp.float32)
    params = init_params(kp, D, H, O)
    ref = reference_forward(x, params)

    # 1) Strict f32 validation path (exact module semantics).
    out_f32 = jax.block_until_ready(
        rnn_imc_forward(x, params, matmul_dtype=jnp.float32))
    assert out_f32.shape == (B, O)
    assert jnp.allclose(out_f32, ref, atol=1e-5, rtol=1e-5), "f32 mismatch vs reference"

    # 2) Default bf16-recurrence path (performance default), relaxed tolerance.
    out_bf16 = jax.block_until_ready(rnn_imc_forward(x, params))
    assert out_bf16.shape == (B, O)
    assert jnp.allclose(out_bf16, ref, atol=1e-1, rtol=5e-2), "bf16 mismatch vs reference"

    # 3) Multi-chunk path with a non-divisible tail (T=20, Tc=8), strict f32.
    T2 = 20
    x2 = jax.random.normal(kx2, (B, T2, D), jnp.float32)
    out2 = jax.block_until_ready(
        rnn_imc_forward(x2, params, max_time_chunk=8, matmul_dtype=jnp.float32))
    ref2 = reference_forward(x2, params)
    assert jnp.allclose(out2, ref2, atol=1e-5, rtol=1e-5), "chunked mismatch vs reference"

    print("KERNEL_OK")
</pallas_src>

<mosaic_0001>
module attributes {stable_mosaic.version = 11 : i64} {
  func.func @_rnn_recurrence_kernel(%arg0: i32, %arg1: i32, %arg2: memref<8x2x32xf32, #tpu.memory_space<vmem>>, %arg3: memref<32x32xf32, #tpu.memory_space<vmem>>, %arg4: memref<32x10xf32, #tpu.memory_space<vmem>>, %arg5: memref<1x10xf32, #tpu.memory_space<vmem>>, %arg6: memref<2x10xf32, #tpu.memory_space<vmem>>, %arg7: memref<2x32xf32, #tpu.memory_space<vmem>>) attributes {dimension_semantics = [#tpu.dimension_semantics<parallel>, #tpu.dimension_semantics<arbitrary>], iteration_bounds = array<i64: 1, 1>, scalar_prefetch = 0 : i64, scratch_operands = 1 : i64, tpu.core_type = #tpu.core_type<tc>, window_params = [{transform_indices = @transform_0, window_bounds = array<i64: 8, 2, 32>}, {pipeline_mode = #tpu.pipeline_mode<synchronous>, transform_indices = @transform_1, window_bounds = array<i64: 32, 32>}, {pipeline_mode = #tpu.pipeline_mode<synchronous>, transform_indices = @transform_2, window_bounds = array<i64: 32, 10>}, {pipeline_mode = #tpu.pipeline_mode<synchronous>, transform_indices = @transform_3, window_bounds = array<i64: 1, 10>}, {transform_indices = @transform_4, window_bounds = array<i64: 2, 10>}]} {
    %c0_i32 = arith.constant 0 : i32
    %0 = arith.cmpi eq, %arg1, %c0_i32 : i32
    %1 = arith.extui %0 : i1 to i32
    %c0_i32_0 = arith.constant 0 : i32
    %2 = arith.cmpi ne, %1, %c0_i32_0 : i32
    scf.if %2 {
      %cst_40 = arith.constant 0.000000e+00 : f32
      %65 = vector.broadcast %cst_40 : f32 to vector<2x32xf32>
      %c0_41 = arith.constant 0 : index
      %c0_42 = arith.constant 0 : index
      %66 = vector.load %arg7[%c0_41, %c0_42] : memref<2x32xf32, #tpu.memory_space<vmem>>, vector<2x32xf32>
      tpu.vector_store %arg7[%c0_41, %c0_42], %65 {strides = array<i32>} : memref<2x32xf32, #tpu.memory_space<vmem>>, vector<2x32xf32>,
    } else {
    }
    %c0 = arith.constant 0 : index
    %c0_1 = arith.constant 0 : index
    %3 = vector.load %arg3[%c0, %c0_1] : memref<32x32xf32, #tpu.memory_space<vmem>>, vector<32x32xf32>
    %c0_2 = arith.constant 0 : index
    %c0_3 = arith.constant 0 : index
    %4 = vector.load %arg7[%c0_2, %c0_3] : memref<2x32xf32, #tpu.memory_space<vmem>>, vector<2x32xf32>
    %c0_i32_4 = arith.constant 0 : i32
    %5 = arith.index_cast %c0_i32_4 : i32 to index
    %c0_5 = arith.constant 0 : index
    %c0_6 = arith.constant 0 : index
    %6 = vector.load %arg2[%5, %c0_5, %c0_6] : memref<8x2x32xf32, #tpu.memory_space<vmem>>, vector<1x2x32xf32>
    %7 = vector.shape_cast %6 : vector<1x2x32xf32> to vector<2x32xf32>
    %cst = arith.constant dense<0.000000e+00> : vector<2x32xf32>
    %8 = tpu.matmul %4, %3, %cst {dimension_numbers = #tpu.dot_dimension_numbers<[1], [0], [0], [1], [0, 0, 1, 1], [], []>} : vector<2x32xf32>, vector<32x32xf32>, vector<2x32xf32> -> vector<2x32xf32>
    %9 = arith.addf %7, %8 : vector<2x32xf32>
    %cst_7 = arith.constant 0.000000e+00 : f32
    %10 = vector.broadcast %cst_7 : f32 to vector<2x32xf32>
    %11 = arith.maximumf %9, %10 : vector<2x32xf32>
    %c1_i32 = arith.constant 1 : i32
    %12 = arith.index_cast %c1_i32 : i32 to index
    %c0_8 = arith.constant 0 : index
    %c0_9 = arith.constant 0 : index
    %13 = vector.load %arg2[%12, %c0_8, %c0_9] : memref<8x2x32xf32, #tpu.memory_space<vmem>>, vector<1x2x32xf32>
    %14 = vector.shape_cast %13 : vector<1x2x32xf32> to vector<2x32xf32>
    %cst_10 = arith.constant dense<0.000000e+00> : vector<2x32xf32>
    %15 = tpu.matmul %11, %3, %cst_10 {dimension_numbers = #tpu.dot_dimension_numbers<[1], [0], [0], [1], [0, 0, 1, 1], [], []>} : vector<2x32xf32>, vector<32x32xf32>, vector<2x32xf32> -> vector<2x32xf32>
    %16 = arith.addf %14, %15 : vector<2x32xf32>
    %cst_11 = arith.constant 0.000000e+00 : f32
    %17 = vector.broadcast %cst_11 : f32 to vector<2x32xf32>
    %18 = arith.maximumf %16, %17 : vector<2x32xf32>
    %c2_i32 = arith.constant 2 : i32
    %19 = arith.index_cast %c2_i32 : i32 to index
    %c0_12 = arith.constant 0 : index
    %c0_13 = arith.constant 0 : index
    %20 = vector.load %arg2[%19, %c0_12, %c0_13] : memref<8x2x32xf32, #tpu.memory_space<vmem>>, vector<1x2x32xf32>
    %21 = vector.shape_cast %20 : vector<1x2x32xf32> to vector<2x32xf32>
    %cst_14 = arith.constant dense<0.000000e+00> : vector<2x32xf32>
    %22 = tpu.matmul %18, %3, %cst_14 {dimension_numbers = #tpu.dot_dimension_numbers<[1], [0], [0], [1], [0, 0, 1, 1], [], []>} : vector<2x32xf32>, vector<32x32xf32>, vector<2x32xf32> -> vector<2x32xf32>
    %23 = arith.addf %21, %22 : vector<2x32xf32>
    %cst_15 = arith.constant 0.000000e+00 : f32
    %24 = vector.broadcast %cst_15 : f32 to vector<2x32xf32>
    %25 = arith.maximumf %23, %24 : vector<2x32xf32>
    %c3_i32 = arith.constant 3 : i32
    %26 = arith.index_cast %c3_i32 : i32 to index
    %c0_16 = arith.constant 0 : index
    %c0_17 = arith.constant 0 : index
    %27 = vector.load %arg2[%26, %c0_16, %c0_17] : memref<8x2x32xf32, #tpu.memory_space<vmem>>, vector<1x2x32xf32>
    %28 = vector.shape_cast %27 : vector<1x2x32xf32> to vector<2x32xf32>
    %cst_18 = arith.constant dense<0.000000e+00> : vector<2x32xf32>
    %29 = tpu.matmul %25, %3, %cst_18 {dimension_numbers = #tpu.dot_dimension_numbers<[1], [0], [0], [1], [0, 0, 1, 1], [], []>} : vector<2x32xf32>, vector<32x32xf32>, vector<2x32xf32> -> vector<2x32xf32>
    %30 = arith.addf %28, %29 : vector<2x32xf32>
    %cst_19 = arith.constant 0.000000e+00 : f32
    %31 = vector.broadcast %cst_19 : f32 to vector<2x32xf32>
    %32 = arith.maximumf %30, %31 : vector<2x32xf32>
    %c4_i32 = arith.constant 4 : i32
    %33 = arith.index_cast %c4_i32 : i32 to index
    %c0_20 = arith.constant 0 : index
    %c0_21 = arith.constant 0 : index
    %34 = vector.load %arg2[%33, %c0_20, %c0_21] : memref<8x2x32xf32, #tpu.memory_space<vmem>>, vector<1x2x32xf32>
    %35 = vector.shape_cast %34 : vector<1x2x32xf32> to vector<2x32xf32>
    %cst_22 = arith.constant dense<0.000000e+00> : vector<2x32xf32>
    %36 = tpu.matmul %32, %3, %cst_22 {dimension_numbers = #tpu.dot_dimension_numbers<[1], [0], [0], [1], [0, 0, 1, 1], [], []>} : vector<2x32xf32>, vector<32x32xf32>, vector<2x32xf32> -> vector<2x32xf32>
    %37 = arith.addf %35, %36 : vector<2x32xf32>
    %cst_23 = arith.constant 0.000000e+00 : f32
    %38 = vector.broadcast %cst_23 : f32 to vector<2x32xf32>
    %39 = arith.maximumf %37, %38 : vector<2x32xf32>
    %c5_i32 = arith.constant 5 : i32
    %40 = arith.index_cast %c5_i32 : i32 to index
    %c0_24 = arith.constant 0 : index
    %c0_25 = arith.constant 0 : index
    %41 = vector.load %arg2[%40, %c0_24, %c0_25] : memref<8x2x32xf32, #tpu.memory_space<vmem>>, vector<1x2x32xf32>
    %42 = vector.shape_cast %41 : vector<1x2x32xf32> to vector<2x32xf32>
    %cst_26 = arith.constant dense<0.000000e+00> : vector<2x32xf32>
    %43 = tpu.matmul %39, %3, %cst_26 {dimension_numbers = #tpu.dot_dimension_numbers<[1], [0], [0], [1], [0, 0, 1, 1], [], []>} : vector<2x32xf32>, vector<32x32xf32>, vector<2x32xf32> -> vector<2x32xf32>
    %44 = arith.addf %42, %43 : vector<2x32xf32>
    %cst_27 = arith.constant 0.000000e+00 : f32
    %45 = vector.broadcast %cst_27 : f32 to vector<2x32xf32>
    %46 = arith.maximumf %44, %45 : vector<2x32xf32>
    %c6_i32 = arith.constant 6 : i32
    %47 = arith.index_cast %c6_i32 : i32 to index
    %c0_28 = arith.constant 0 : index
    %c0_29 = arith.constant 0 : index
    %48 = vector.load %arg2[%47, %c0_28, %c0_29] : memref<8x2x32xf32, #tpu.memory_space<vmem>>, vector<1x2x32xf32>
    %49 = vector.shape_cast %48 : vector<1x2x32xf32> to vector<2x32xf32>
    %cst_30 = arith.constant dense<0.000000e+00> : vector<2x32xf32>
    %50 = tpu.matmul %46, %3, %cst_30 {dimension_numbers = #tpu.dot_dimension_numbers<[1], [0], [0], [1], [0, 0, 1, 1], [], []>} : vector<2x32xf32>, vector<32x32xf32>, vector<2x32xf32> -> vector<2x32xf32>
    %51 = arith.addf %49, %50 : vector<2x32xf32>
    %cst_31 = arith.constant 0.000000e+00 : f32
    %52 = vector.broadcast %cst_31 : f32 to vector<2x32xf32>
    %53 = arith.maximumf %51, %52 : vector<2x32xf32>
    %c7_i32 = arith.constant 7 : i32
    %54 = arith.index_cast %c7_i32 : i32 to index
    %c0_32 = arith.constant 0 : index
    %c0_33 = arith.constant 0 : index
    %55 = vector.load %arg2[%54, %c0_32, %c0_33] : memref<8x2x32xf32, #tpu.memory_space<vmem>>, vector<1x2x32xf32>
    %56 = vector.shape_cast %55 : vector<1x2x32xf32> to vector<2x32xf32>
    %cst_34 = arith.constant dense<0.000000e+00> : vector<2x32xf32>
    %57 = tpu.matmul %53, %3, %cst_34 {dimension_numbers = #tpu.dot_dimension_numbers<[1], [0], [0], [1], [0, 0, 1, 1], [], []>} : vector<2x32xf32>, vector<32x32xf32>, vector<2x32xf32> -> vector<2x32xf32>
    %58 = arith.addf %56, %57 : vector<2x32xf32>
    %cst_35 = arith.constant 0.000000e+00 : f32
    %59 = vector.broadcast %cst_35 : f32 to vector<2x32xf32>
    %60 = arith.maximumf %58, %59 : vector<2x32xf32>
    %c8_i32 = arith.constant 8 : i32
    %c0_36 = arith.constant 0 : index
    %c0_37 = arith.constant 0 : index
    %61 = vector.load %arg7[%c0_36, %c0_37] : memref<2x32xf32, #tpu.memory_space<vmem>>, vector<2x32xf32>
    tpu.vector_store %arg7[%c0_36, %c0_37], %60 {strides = array<i32>} : memref<2x32xf32, #tpu.memory_space<vmem>>, vector<2x32xf32>,
    %c0_i32_38 = arith.constant 0 : i32
    %62 = arith.cmpi eq, %arg1, %c0_i32_38 : i32
    %63 = arith.extui %62 : i1 to i32
    %c0_i32_39 = arith.constant 0 : i32
    %64 = arith.cmpi ne, %63, %c0_i32_39 : i32
    scf.if %64 {
      %c0_40 = arith.constant 0 : index
      %c0_41 = arith.constant 0 : index
      %65 = vector.load %arg7[%c0_40, %c0_41] : memref<2x32xf32, #tpu.memory_space<vmem>>, vector<2x32xf32>
      %c0_42 = arith.constant 0 : index
      %c0_43 = arith.constant 0 : index
      %66 = vector.load %arg4[%c0_42, %c0_43] : memref<32x10xf32, #tpu.memory_space<vmem>>, vector<32x10xf32>
      %cst_44 = arith.constant dense<0.000000e+00> : vector<2x10xf32>
      %67 = tpu.matmul %65, %66, %cst_44 {dimension_numbers = #tpu.dot_dimension_numbers<[1], [0], [0], [1], [0, 0, 1, 1], [], []>} : vector<2x32xf32>, vector<32x10xf32>, vector<2x10xf32> -> vector<2x10xf32>
      %c0_45 = arith.constant 0 : index
      %c0_46 = arith.constant 0 : index
      %68 = vector.load %arg5[%c0_45, %c0_46] : memref<1x10xf32, #tpu.memory_space<vmem>>, vector<1x10xf32>
      %69 = vector.broadcast %68 : vector<1x10xf32> to vector<2x10xf32>
      %70 = arith.addf %67, %69 : vector<2x10xf32>
      %c0_47 = arith.constant 0 : index
      %c0_48 = arith.constant 0 : index
      %71 = vector.load %arg6[%c0_47, %c0_48] : memref<2x10xf32, #tpu.memory_space<vmem>>, vector<2x10xf32>
      tpu.vector_store %arg6[%c0_47, %c0_48], %70 {strides = array<i32>} : memref<2x10xf32, #tpu.memory_space<vmem>>, vector<2x10xf32>,
    } else {
    }
    return
  }
  func.func @transform_0(%arg0: i32, %arg1: i32) -> (i32, i32, i32) {
    %c0_i32 = arith.constant 0 : i32
    %c0_i32_0 = arith.constant 0 : i32
    return %arg1, %arg0, %c0_i32 : i32, i32, i32
  }
  func.func @transform_1(%arg0: i32, %arg1: i32) -> (i32, i32) {
    %c0_i32 = arith.constant 0 : i32
    %c0_i32_0 = arith.constant 0 : i32
    %c0_i32_1 = arith.constant 0 : i32
    return %c0_i32, %c0_i32_0 : i32, i32
  }
  func.func @transform_2(%arg0: i32, %arg1: i32) -> (i32, i32) {
    %c0_i32 = arith.constant 0 : i32
    %c0_i32_0 = arith.constant 0 : i32
    %c0_i32_1 = arith.constant 0 : i32
    return %c0_i32, %c0_i32_0 : i32, i32
  }
  func.func @transform_3(%arg0: i32, %arg1: i32) -> (i32, i32) {
    %c0_i32 = arith.constant 0 : i32
    %c0_i32_0 = arith.constant 0 : i32
    %c0_i32_1 = arith.constant 0 : i32
    return %c0_i32, %c0_i32_0 : i32, i32
  }
  func.func @transform_4(%arg0: i32, %arg1: i32) -> (i32, i32) {
    %c0_i32 = arith.constant 0 : i32
    %c0_i32_0 = arith.constant 0 : i32
    return %arg0, %c0_i32 : i32, i32
  }
}

</mosaic_0001>

<llo_original>
// kernel: tpu_custom_call.1
$region0: #{tpu_custom_call.1}
  #allocation0 [shape = 'u32[]', space=smem, size = 0x4, offset = 0x4, fixed_abs, tag = 'smem constant byte address 0x4 - core index']
  #allocation1 [shape = 'u32[72,128]{1,0:T(1,128)}', space=vmem, size = 0x9000, scoped, tag = 'internal scratch']
  #allocation2 [shape = 'f32[2,32]{1,0:T(2,128)}', space=vmem, size = 0x400, scoped, tag = 'scratch operand']
  %s0 = inlined_call_operand.vmem [shape: f32[8,2,32], index: 0, kind: input, shape index: {}]
  %s1 = inlined_call_operand.vmem [shape: f32[32,32], index: 1, kind: input, shape index: {}]
  %s2 = inlined_call_operand.vmem [shape: f32[32,10], index: 2, kind: input, shape index: {}]
  %s3 = inlined_call_operand.vmem [shape: f32[1,10], index: 3, kind: input, shape index: {}]
  %s4 = inlined_call_operand.hbm [shape: f32[2,10], index: 4, kind: output, shape index: {}]
  %s5 = sld [smem:[#allocation0]]
  $region34: #{tpu_custom_call.1} parent=0
    _
  %s7 = ssub.s32 1, %s5
  %s8 = scalar_select 0, %s7, %s5
  $region1: #{tpu_custom_call.1} parent=0
    #allocation3 [shape = 'u8[1024]{0}', space=vmem, size = 0x400, scoped, tag = 'output window, operand 0, single buffered']
    #allocation4 [shape = 's32[1]{0}', space=sflag, size = 0x4, scoped, tag = 'scoped memory for tpu_custom_call.1']
    %9 = vsyncpa [#allocation4], 0
    // Predicated region
    $region2: #{tpu_custom_call.1} parent=1 // pred_check
      _
    $region3: #{tpu_custom_call.1} parent=1 // pred_check_branch
      %11 = sbr.rel (0) target = $region5
    $region4: #{tpu_custom_call.1} parent=1 // pred_region
      _
    $region5: #{tpu_custom_call.1} parent=1 // pred_fallthru
      _
    // Predicated region
    $region6: #{tpu_custom_call.1} parent=1 // pred_check
      _
    $region7: #{tpu_custom_call.1} parent=1 // pred_check_branch
      %13 = sbr.rel (0) target = $region9
    $region8: #{tpu_custom_call.1} parent=1 // pred_region
      _
    $region9: #{tpu_custom_call.1} parent=1 // pred_fallthru
      _
    // Predicated region
    $region10: #{tpu_custom_call.1} parent=1 // pred_check
      _
    $region11: #{tpu_custom_call.1} parent=1 // pred_check_branch
      %15 = sbr.rel (0) target = $region13
    $region12: #{tpu_custom_call.1} parent=1 // pred_region
      _
    $region13: #{tpu_custom_call.1} parent=1 // pred_fallthru
      _
    // Predicated region
    $region14: #{tpu_custom_call.1} parent=1 // pred_check
      _
    $region15: #{tpu_custom_call.1} parent=1 // pred_check_branch
      %17 = sbr.rel (0) target = $region17
    $region16: #{tpu_custom_call.1} parent=1 // pred_region
      _
    $region17: #{tpu_custom_call.1} parent=1 // pred_fallthru
      _
    %p18 = scmp.eq.s32.totalorder 0, 0
    // Predicated region
    $region18: #{tpu_custom_call.1} parent=1 // pred_check
      %p19 = pneg %p18
    $region19: #{tpu_custom_call.1} parent=1 // pred_check_branch
      %21 = sbr.rel (%p19) target = $region21
    $region20: #{tpu_custom_call.1} parent=1 // pred_region
      %vm22 = vcmask 254976
      %23 = vst.msk [vmem:[#allocation2] sm:$0x3] %vm22, 0.0
    $region21: #{tpu_custom_call.1} parent=1 // pred_fallthru
      _
    %v24 = vld [vmem:[%s1] sm:$0xff]
    %v25 = vld [vmem:[%s1 + $0x8] sm:$0xff]
    %v26 = vld [vmem:[%s1 + $0x10] sm:$0xff]
    %v27 = vld [vmem:[%s1 + $0x18] sm:$0xff]
    %v28 = vld [vmem:[#allocation2] sm:$0x3]
    %v29 = vld [vmem:[%s0] sm:$0x3]
    %vm30 = vcmask 261120
    %v32 = vsel %vm30, %v28, 0
    %34 = vmatpush.msra.mxu0 0.0
    %35 = vmatpush.msra.mxu0 0.0
    %36 = vmatpush.msra.mxu0 0.0
    %37 = vmatpush.msra.mxu0 0.0
    %38 = vmatpush.msra.mxu0 0.0
    %39 = vmatpush.msra.mxu0 0.0
    %40 = vmatpush.msra.mxu0 0.0
    %41 = vmatpush.msra.mxu0 0.0
    %42 = vmatpush.msra.mxu0 0.0
    %43 = vmatpush.msra.mxu0 0.0
    %44 = vmatpush.msra.mxu0 0.0
    %45 = vmatpush.msra.mxu0 0.0
    %46 = vmatpush.msra.mxu0 %v27
    %47 = vmatpush.msra.mxu0 %v26
    %48 = vmatpush.msra.mxu0 %v25
    %49 = vmatpush.msra.mxu0 %v24
    %50 = vmatmul.f32.gmra.mxu0 %v32
    %v51 = vpop.f32.mrf.mxu0
    %v52 = vadd.f32 0.0, %v51
    %53 = vdwg.mxu0
    %v54 = vadd.f32 %v29, %v52
    %v55 = vmax.f32 %v54, 0.0
    %s56 = scalar_lea.vmem %s0, 2
    %v57 = vld [vmem:[%s56] sm:$0x3]
    %v59 = vsel %vm30, %v55, 0
    %61 = vmatpush.msra.mxu0 0.0
    %62 = vmatpush.msra.mxu0 0.0
    %63 = vmatpush.msra.mxu0 0.0
    %64 = vmatpush.msra.mxu0 0.0
    %65 = vmatpush.msra.mxu0 0.0
    %66 = vmatpush.msra.mxu0 0.0
    %67 = vmatpush.msra.mxu0 0.0
    %68 = vmatpush.msra.mxu0 0.0
    %69 = vmatpush.msra.mxu0 0.0
    %70 = vmatpush.msra.mxu0 0.0
    %71 = vmatpush.msra.mxu0 0.0
    %72 = vmatpush.msra.mxu0 0.0
    %73 = vmatpush.msra.mxu0 %v27
    %74 = vmatpush.msra.mxu0 %v26
    %75 = vmatpush.msra.mxu0 %v25
    %76 = vmatpush.msra.mxu0 %v24
    %77 = vmatmul.f32.gmra.mxu0 %v59
    %v78 = vpop.f32.mrf.mxu0
    %v79 = vadd.f32 0.0, %v78
    %80 = vdwg.mxu0
    %v81 = vadd.f32 %v57, %v79
    %v82 = vmax.f32 %v81, 0.0
    %s83 = scalar_lea.vmem %s0, 4
    %v84 = vld [vmem:[%s83] sm:$0x3]
    %v86 = vsel %vm30, %v82, 0
    %88 = vmatpush.msra.mxu0 0.0
    %89 = vmatpush.msra.mxu0 0.0
    %90 = vmatpush.msra.mxu0 0.0
    %91 = vmatpush.msra.mxu0 0.0
    %92 = vmatpush.msra.mxu0 0.0
    %93 = vmatpush.msra.mxu0 0.0
    %94 = vmatpush.msra.mxu0 0.0
    %95 = vmatpush.msra.mxu0 0.0
    %96 = vmatpush.msra.mxu0 0.0
    %97 = vmatpush.msra.mxu0 0.0
    %98 = vmatpush.msra.mxu0 0.0
    %99 = vmatpush.msra.mxu0 0.0
    %100 = vmatpush.msra.mxu0 %v27
    %101 = vmatpush.msra.mxu0 %v26
    %102 = vmatpush.msra.mxu0 %v25
    %103 = vmatpush.msra.mxu0 %v24
    %104 = vmatmul.f32.gmra.mxu0 %v86
    %v105 = vpop.f32.mrf.mxu0
    %v106 = vadd.f32 0.0, %v105
    %107 = vdwg.mxu0
    %v108 = vadd.f32 %v84, %v106
    %v109 = vmax.f32 %v108, 0.0
    %s110 = scalar_lea.vmem %s0, 6
    %v111 = vld [vmem:[%s110] sm:$0x3]
    %v113 = vsel %vm30, %v109, 0
    %115 = vmatpush.msra.mxu0 0.0
    %116 = vmatpush.msra.mxu0 0.0
    %117 = vmatpush.msra.mxu0 0.0
    %118 = vmatpush.msra.mxu0 0.0
    %119 = vmatpush.msra.mxu0 0.0
    %120 = vmatpush.msra.mxu0 0.0
    %121 = vmatpush.msra.mxu0 0.0
    %122 = vmatpush.msra.mxu0 0.0
    %123 = vmatpush.msra.mxu0 0.0
    %124 = vmatpush.msra.mxu0 0.0
    %125 = vmatpush.msra.mxu0 0.0
    %126 = vmatpush.msra.mxu0 0.0
    %127 = vmatpush.msra.mxu0 %v27
    %128 = vmatpush.msra.mxu0 %v26
    %129 = vmatpush.msra.mxu0 %v25
    %130 = vmatpush.msra.mxu0 %v24
    %131 = vmatmul.f32.gmra.mxu0 %v113
    %v132 = vpop.f32.mrf.mxu0
    %v133 = vadd.f32 0.0, %v132
    %134 = vdwg.mxu0
    %v135 = vadd.f32 %v111, %v133
    %v136 = vmax.f32 %v135, 0.0
    %s137 = scalar_lea.vmem %s0, 8
    %v138 = vld [vmem:[%s137] sm:$0x3]
    %v140 = vsel %vm30, %v136, 0
    %142 = vmatpush.msra.mxu0 0.0
    %143 = vmatpush.msra.mxu0 0.0
    %144 = vmatpush.msra.mxu0 0.0
    %145 = vmatpush.msra.mxu0 0.0
    %146 = vmatpush.msra.mxu0 0.0
    %147 = vmatpush.msra.mxu0 0.0
    %148 = vmatpush.msra.mxu0 0.0
    %149 = vmatpush.msra.mxu0 0.0
    %150 = vmatpush.msra.mxu0 0.0
    %151 = vmatpush.msra.mxu0 0.0
    %152 = vmatpush.msra.mxu0 0.0
    %153 = vmatpush.msra.mxu0 0.0
    %154 = vmatpush.msra.mxu0 %v27
    %155 = vmatpush.msra.mxu0 %v26
    %156 = vmatpush.msra.mxu0 %v25
    %157 = vmatpush.msra.mxu0 %v24
    %158 = vmatmul.f32.gmra.mxu0 %v140
    %v159 = vpop.f32.mrf.mxu0
    %v160 = vadd.f32 0.0, %v159
    %161 = vdwg.mxu0
    %v162 = vadd.f32 %v138, %v160
    %v163 = vmax.f32 %v162, 0.0
    %s164 = scalar_lea.vmem %s0, 10
    %v165 = vld [vmem:[%s164] sm:$0x3]
    %v167 = vsel %vm30, %v163, 0
    %169 = vmatpush.msra.mxu0 0.0
    %170 = vmatpush.msra.mxu0 0.0
    %171 = vmatpush.msra.mxu0 0.0
    %172 = vmatpush.msra.mxu0 0.0
    %173 = vmatpush.msra.mxu0 0.0
    %174 = vmatpush.msra.mxu0 0.0
    %175 = vmatpush.msra.mxu0 0.0
    %176 = vmatpush.msra.mxu0 0.0
    %177 = vmatpush.msra.mxu0 0.0
    %178 = vmatpush.msra.mxu0 0.0
    %179 = vmatpush.msra.mxu0 0.0
    %180 = vmatpush.msra.mxu0 0.0
    %181 = vmatpush.msra.mxu0 %v27
    %182 = vmatpush.msra.mxu0 %v26
    %183 = vmatpush.msra.mxu0 %v25
    %184 = vmatpush.msra.mxu0 %v24
    %185 = vmatmul.f32.gmra.mxu0 %v167
    %v186 = vpop.f32.mrf.mxu0
    %v187 = vadd.f32 0.0, %v186
    %188 = vdwg.mxu0
    %v189 = vadd.f32 %v165, %v187
    %v190 = vmax.f32 %v189, 0.0
    %s191 = scalar_lea.vmem %s0, 12
    %v192 = vld [vmem:[%s191] sm:$0x3]
    %v194 = vsel %vm30, %v190, 0
    %196 = vmatpush.msra.mxu0 0.0
    %197 = vmatpush.msra.mxu0 0.0
    %198 = vmatpush.msra.mxu0 0.0
    %199 = vmatpush.msra.mxu0 0.0
    %200 = vmatpush.msra.mxu0 0.0
    %201 = vmatpush.msra.mxu0 0.0
    %202 = vmatpush.msra.mxu0 0.0
    %203 = vmatpush.msra.mxu0 0.0
    %204 = vmatpush.msra.mxu0 0.0
    %205 = vmatpush.msra.mxu0 0.0
    %206 = vmatpush.msra.mxu0 0.0
    %207 = vmatpush.msra.mxu0 0.0
    %208 = vmatpush.msra.mxu0 %v27
    %209 = vmatpush.msra.mxu0 %v26
    %210 = vmatpush.msra.mxu0 %v25
    %211 = vmatpush.msra.mxu0 %v24
    %212 = vmatmul.f32.gmra.mxu0 %v194
    %v213 = vpop.f32.mrf.mxu0
    %v214 = vadd.f32 0.0, %v213
    %215 = vdwg.mxu0
    %v216 = vadd.f32 %v192, %v214
    %v217 = vmax.f32 %v216, 0.0
    %s218 = scalar_lea.vmem %s0, 14
    %v219 = vld [vmem:[%s218] sm:$0x3]
    %v221 = vsel %vm30, %v217, 0
    %223 = vmatpush.msra.mxu0 0.0
    %224 = vmatpush.msra.mxu0 0.0
    %225 = vmatpush.msra.mxu0 0.0
    %226 = vmatpush.msra.mxu0 0.0
    %227 = vmatpush.msra.mxu0 0.0
    %228 = vmatpush.msra.mxu0 0.0
    %229 = vmatpush.msra.mxu0 0.0
    %230 = vmatpush.msra.mxu0 0.0
    %231 = vmatpush.msra.mxu0 0.0
    %232 = vmatpush.msra.mxu0 0.0
    %233 = vmatpush.msra.mxu0 0.0
    %234 = vmatpush.msra.mxu0 0.0
    %235 = vmatpush.msra.mxu0 %v27
    %236 = vmatpush.msra.mxu0 %v26
    %237 = vmatpush.msra.mxu0 %v25
    %238 = vmatpush.msra.mxu0 %v24
    %239 = vmatmul.f32.gmra.mxu0 %v221
    %v240 = vpop.f32.mrf.mxu0
    %v241 = vadd.f32 0.0, %v240
    %242 = vdwg.mxu0
    %v243 = vadd.f32 %v219, %v241
    %v244 = vmax.f32 %v243, 0.0
    %vm245 = vcmask 254976
    %246 = vst.msk [vmem:[#allocation2] sm:$0x3] %vm245, %v244
    // Predicated region
    $region22: #{tpu_custom_call.1} parent=1 // pred_check
      %p247 = pneg %p18
    $region23: #{tpu_custom_call.1} parent=1 // pred_check_branch
      %249 = sbr.rel (%p247) target = $region25
    $region24: #{tpu_custom_call.1} parent=1 // pred_region
      %v250 = vld [vmem:[#allocation2] sm:$0x3]
      %v251 = vld [vmem:[%s2] sm:$0xff]
      %v252 = vld [vmem:[%s2 + $0x8] sm:$0xff]
      %v253 = vld [vmem:[%s2 + $0x10] sm:$0xff]
      %v254 = vld [vmem:[%s2 + $0x18] sm:$0xff]
      %v255 = vld [vmem:[%s3] sm:$0x1]
      %v257 = vperm.slane %v255, 0
      %v260 = vsel %vm30, %v250, 0
      %262 = vmatpush.msra.mxu0 0.0
      %263 = vmatpush.msra.mxu0 0.0
      %264 = vmatpush.msra.mxu0 0.0
      %265 = vmatpush.msra.mxu0 0.0
      %266 = vmatpush.msra.mxu0 0.0
      %267 = vmatpush.msra.mxu0 0.0
      %268 = vmatpush.msra.mxu0 0.0
      %269 = vmatpush.msra.mxu0 0.0
      %270 = vmatpush.msra.mxu0 0.0
      %271 = vmatpush.msra.mxu0 0.0
      %272 = vmatpush.msra.mxu0 0.0
      %273 = vmatpush.msra.mxu0 0.0
      %274 = vmatpush.msra.mxu0 %v254
      %275 = vmatpush.msra.mxu0 %v253
      %276 = vmatpush.msra.mxu0 %v252
      %277 = vmatpush.msra.mxu0 %v251
      %278 = vmatmul.f32.gmra.mxu0 %v260
      %v279 = vpop.f32.mrf.mxu0
      %v280 = vadd.f32 %v257, %v279
      %281 = vdwg.mxu0
      %vm282 = vcmask 74752
      %283 = vst.msk [vmem:[#allocation3] sm:$0x3] %vm282, %v280
    $region25: #{tpu_custom_call.1} parent=1 // pred_fallthru
      _
    // Predicated region
    $region26: #{tpu_custom_call.1} parent=1 // pred_check
      _
    $region27: #{tpu_custom_call.1} parent=1 // pred_check_branch
      %285 = sbr.rel (0) target = $region29
    $region28: #{tpu_custom_call.1} parent=1 // pred_region
      %287 = vsyncadd [#allocation4], 0
      %s289 = sshll.u32 [#allocation3], 4
      %s290 = int_to_ptr.vmem [resolvable:$true] %s289
      %s291 = sshll.u32 %s4, 4
      %s292 = int_to_ptr.hbm [resolvable:$true] %s291
      %294 = dma.vmem_to_hbm [thread:$0]  %s290, 32, %s292, [#allocation4]
    $region29: #{tpu_custom_call.1} parent=1 // pred_fallthru
      _
    // Predicated region
    $region30: #{tpu_custom_call.1} parent=1 // pred_check
      _
    $region31: #{tpu_custom_call.1} parent=1 // pred_check_branch
      %296 = sbr.rel (0) target = $region33
    $region32: #{tpu_custom_call.1} parent=1 // pred_region
      %298 = dma.done [#allocation4], 32
    $region33: #{tpu_custom_call.1} parent=1 // pred_fallthru
      _
    %299 = vsyncpa [#allocation4], 1

</llo_original>
